<compile_context>
chip_gen: v7x
topology: tpu7x:2x2x1
jax: 0.10.0
libtpu: 0.0.40
codegen_flags: <defaults>
</compile_context>

<pallas_src>
import functools

import jax
import jax.numpy as jnp
from jax.experimental import pallas as pl
from jax.experimental.pallas import tpu as pltpu


def _proj_relu_kernel(x_ref, w_ref, b_ref, o_ref):
    # x_ref: [TM, K]   (K = factor * n_units)   -- streamed row tile
    # w_ref: [Np, K]   (nn.Linear weight, rows zero-padded N -> Np) -- resident
    # b_ref: [1, Np]   (f32)                                        -- resident
    # o_ref: [TM, Np]
    acc = jax.lax.dot_general(
        x_ref[...], w_ref[...],
        dimension_numbers=(((1,), (1,)), ((), ())),  # contract K with K (weight stays [N, K])
        preferred_element_type=jnp.float32,
    )
    acc = acc + b_ref[...].astype(jnp.float32)
    o_ref[...] = jnp.maximum(acc, 0.0).astype(o_ref.dtype)


def _round_up(x, m):
    return (x + m - 1) // m * m


def _pick_tile_m(M, K, Np, itemsize, budget_bytes):
    """Largest sublane-aligned row tile whose pipeline fits the VMEM budget."""
    resident = 2 * (Np * K + Np) * itemsize      # weight + bias (conservative 2x buffers)
    per_row = 2 * (K + Np) * 4                   # double-buffered x row + f32 out row
    avail = budget_bytes - resident
    tm = avail // per_row if avail > 0 else 8
    tm = int(max(8, min(1024, tm)))
    tm = (tm // 8) * 8                           # sublane multiple
    if M <= tm:
        return M                                 # single block == full dim (always legal)
    return tm


def concat_subsampler(xs, xlens, weight, bias, factor,
                      compute_dtype=None, tile_m=None):
    """JAX/Pallas equivalent of ConcatSubsampler.forward (batch_first=True).

    Args:
        xs:      [B, T, F] float array (F == n_units)
        xlens:   [B] int array
        weight:  [n_units, n_units*factor]  (nn.Linear weight, natural layout)
        bias:    [n_units]
        factor:  subsampling factor (static Python int)
        compute_dtype: optional (e.g. jnp.bfloat16) to run the MXU in reduced
            precision; accumulation/bias/ReLU stay f32, output keeps xs.dtype.
        tile_m:  optional row-tile override (testing / tuning).
    Returns:
        (out [B, T//factor, n_units], new_xlens [B])
    """
    if factor == 1:
        return xs, xlens

    B, T, F = xs.shape
    N, K = weight.shape
    assert K == factor * F, "weight must be [n_units, n_units*factor]"
    Tp = T // factor  # frames with (t+1) % factor == 0

    # Chronological concat of `factor` successive frames == row-major reshape.
    # Free (no HBM copy) when T is a multiple of factor.
    # TODO(synk): when T % factor != 0, fold the trailing-frame slice into the
    # kernel's input DMA (allow_input_fusion) instead of a separate HBM pass.
    x = xs if T == Tp * factor else xs[:, : Tp * factor, :]
    x_cat = x.reshape(B * Tp, K)

    if compute_dtype is not None:
        x_cat = x_cat.astype(compute_dtype)
        weight = weight.astype(compute_dtype)

    M = B * Tp

    # Lane-align the output width (no-op when n_units % 128 == 0).
    Np = _round_up(N, 128)
    if Np != N:
        weight = jnp.pad(weight, ((0, Np - N), (0, 0)))
        bias = jnp.pad(bias, (0, Np - N))
    bias2d = bias.reshape(1, Np).astype(jnp.float32)

    itemsize = jnp.dtype(x_cat.dtype).itemsize
    out_itemsize = jnp.dtype(xs.dtype).itemsize
    # TODO(synk): if the weight alone exceeds the VMEM budget (very large
    # n_units*factor), add an N/K grid axis instead of shrinking tile_m.
    tm = tile_m if tile_m is not None else _pick_tile_m(
        M, K, Np, itemsize, budget_bytes=32 << 20)
    tm = min(tm, M)
    grid = (pl.cdiv(M, tm),)

    cost = pl.CostEstimate(
        flops=2 * M * K * Np,
        transcendentals=0,
        bytes_accessed=itemsize * (M * K + Np * K + Np) + out_itemsize * M * Np,
    )

    out_flat = pl.pallas_call(
        _proj_relu_kernel,
        out_shape=jax.ShapeDtypeStruct((M, Np), xs.dtype),
        grid=grid,
        in_specs=[
            pl.BlockSpec((tm, K), lambda i: (i, 0)),   # streamed activation row tiles
            pl.BlockSpec((Np, K), lambda i: (0, 0)),   # VMEM-resident weight
            pl.BlockSpec((1, Np), lambda i: (0, 0)),   # VMEM-resident bias
        ],
        out_specs=pl.BlockSpec((tm, Np), lambda i: (i, 0)),
        compiler_params=pltpu.CompilerParams(
            dimension_semantics=("parallel",),         # row tiles are independent
            vmem_limit_bytes=48 << 20,                 # fits v5e/v6e (128 MiB) and v7x (64 MiB)
        ),
        cost_estimate=cost,
    )(x_cat, weight, bias2d)

    out = out_flat[:, :N].reshape(B, Tp, N)
    new_xlens = jnp.maximum(1, xlens // factor).astype(jnp.int32)
    return out, new_xlens


def _reference(xs, xlens, weight, bias, factor):
    """Pure-JAX reference with the same semantics as the PyTorch forward."""
    B, T, F = xs.shape
    Tp = T // factor
    x_cat = xs[:, : Tp * factor, :].reshape(B * Tp, factor * F)
    out = jnp.maximum(x_cat @ weight.T + bias, 0.0).reshape(B, Tp, F)
    new_xlens = jnp.maximum(1, xlens // factor).astype(jnp.int32)
    return out, new_xlens


def _run_case(key, B, T, n_units, factor, xlens_list, tile_m=None):
    k_x, k_w, k_b = jax.random.split(key, 3)
    xs = jax.random.normal(k_x, (B, T, n_units), dtype=jnp.float32)
    xlens = jnp.array(xlens_list, dtype=jnp.int32)

    # Deterministic nn.Linear-style init: U(-1/sqrt(fan_in), 1/sqrt(fan_in)).
    fan_in = n_units * factor
    bound = 1.0 / (fan_in ** 0.5)
    weight = jax.random.uniform(
        k_w, (n_units, n_units * factor), minval=-bound, maxval=bound,
        dtype=jnp.float32)
    bias = jax.random.uniform(
        k_b, (n_units,), minval=-bound, maxval=bound, dtype=jnp.float32)

    fwd = jax.jit(functools.partial(concat_subsampler, factor=factor,
                                    tile_m=tile_m))
    out, new_xlens = fwd(xs, xlens, weight, bias)
    out = jax.block_until_ready(out)
    new_xlens = jax.block_until_ready(new_xlens)

    ref_out, ref_xlens = _reference(xs, xlens, weight, bias, factor)
    Tp = T // factor
    assert out.shape == (B, Tp, n_units), out.shape
    assert jnp.allclose(out, ref_out, atol=1e-5, rtol=1e-5), \
        float(jnp.max(jnp.abs(out - ref_out)))
    assert jnp.array_equal(new_xlens, ref_xlens)


if __name__ == "__main__":
    key = jax.random.PRNGKey(0)
    k1, k2 = jax.random.split(key)

    # Case 1: small, 128-aligned K/N, single block (fast path, no padding).
    _run_case(k1, B=2, T=8, n_units=32, factor=4, xlens_list=[8, 6])

    # Case 2: non-aligned n_units (48 -> padded to 128), T not a multiple of
    # factor (trailing frame dropped), tiny tile_m to exercise grid > 1 with a
    # partial last row block.
    _run_case(k2, B=3, T=9, n_units=48, factor=2, xlens_list=[9, 7, 5],
              tile_m=8)

    print("KERNEL_OK")
</pallas_src>

<mosaic_0001>
module attributes {stable_mosaic.version = 11 : i64} {
  func.func @_proj_relu_kernel(%arg0: i32, %arg1: memref<4x128xf32, #tpu.memory_space<vmem>>, %arg2: memref<128x128xf32, #tpu.memory_space<vmem>>, %arg3: memref<1x128xf32, #tpu.memory_space<vmem>>, %arg4: memref<4x128xf32, #tpu.memory_space<vmem>>) attributes {dimension_semantics = [#tpu.dimension_semantics<parallel>], iteration_bounds = array<i64: 1>, scalar_prefetch = 0 : i64, scratch_operands = 0 : i64, tpu.core_type = #tpu.core_type<tc>, window_params = [{transform_indices = @transform_0, window_bounds = array<i64: 4, 128>}, {pipeline_mode = #tpu.pipeline_mode<synchronous>, transform_indices = @transform_1, window_bounds = array<i64: 128, 128>}, {pipeline_mode = #tpu.pipeline_mode<synchronous>, transform_indices = @transform_2, window_bounds = array<i64: 1, 128>}, {transform_indices = @transform_3, window_bounds = array<i64: 4, 128>}]} {
    %c0 = arith.constant 0 : index
    %c0_0 = arith.constant 0 : index
    %0 = vector.load %arg1[%c0, %c0_0] : memref<4x128xf32, #tpu.memory_space<vmem>>, vector<4x128xf32>
    %c0_1 = arith.constant 0 : index
    %c0_2 = arith.constant 0 : index
    %1 = vector.load %arg2[%c0_1, %c0_2] : memref<128x128xf32, #tpu.memory_space<vmem>>, vector<128x128xf32>
    %cst = arith.constant dense<0.000000e+00> : vector<4x128xf32>
    %2 = tpu.matmul %0, %1, %cst {dimension_numbers = #tpu.dot_dimension_numbers<[1], [1], [0], [0], [0, 0, 1, 0], [], []>} : vector<4x128xf32>, vector<128x128xf32>, vector<4x128xf32> -> vector<4x128xf32>
    %c0_3 = arith.constant 0 : index
    %c0_4 = arith.constant 0 : index
    %3 = vector.load %arg3[%c0_3, %c0_4] : memref<1x128xf32, #tpu.memory_space<vmem>>, vector<1x128xf32>
    %4 = vector.broadcast %3 : vector<1x128xf32> to vector<4x128xf32>
    %5 = arith.addf %2, %4 : vector<4x128xf32>
    %cst_5 = arith.constant 0.000000e+00 : f32
    %6 = vector.broadcast %cst_5 : f32 to vector<4x128xf32>
    %7 = arith.maximumf %5, %6 : vector<4x128xf32>
    %c0_6 = arith.constant 0 : index
    %c0_7 = arith.constant 0 : index
    %8 = vector.load %arg4[%c0_6, %c0_7] : memref<4x128xf32, #tpu.memory_space<vmem>>, vector<4x128xf32>
    tpu.vector_store %arg4[%c0_6, %c0_7], %7 {strides = array<i32>} : memref<4x128xf32, #tpu.memory_space<vmem>>, vector<4x128xf32>,
    return
  }
  func.func @transform_0(%arg0: i32) -> (i32, i32) {
    %c0_i32 = arith.constant 0 : i32
    %c0_i32_0 = arith.constant 0 : i32
    return %arg0, %c0_i32 : i32, i32
  }
  func.func @transform_1(%arg0: i32) -> (i32, i32) {
    %c0_i32 = arith.constant 0 : i32
    %c0_i32_0 = arith.constant 0 : i32
    %c0_i32_1 = arith.constant 0 : i32
    return %c0_i32, %c0_i32_0 : i32, i32
  }
  func.func @transform_2(%arg0: i32) -> (i32, i32) {
    %c0_i32 = arith.constant 0 : i32
    %c0_i32_0 = arith.constant 0 : i32
    %c0_i32_1 = arith.constant 0 : i32
    return %c0_i32, %c0_i32_0 : i32, i32
  }
  func.func @transform_3(%arg0: i32) -> (i32, i32) {
    %c0_i32 = arith.constant 0 : i32
    %c0_i32_0 = arith.constant 0 : i32
    return %arg0, %c0_i32 : i32, i32
  }
}

</mosaic_0001>

<llo_original>
// kernel: concat_subsampler.1
$region0: #{concat_subsampler.1}
  #allocation0 [shape = 'u32[]', space=smem, size = 0x4, offset = 0x4, fixed_abs, tag = 'smem constant byte address 0x4 - core index']
  #allocation1 [shape = 'u32[144,128]{1,0:T(1,128)}', space=vmem, size = 0x12000, scoped, tag = 'internal scratch']
  %s0 = inlined_call_operand.vmem [shape: f32[4,128], index: 0, kind: input, shape index: {}]
  %s1 = inlined_call_operand.vmem [shape: f32[128,128], index: 1, kind: input, shape index: {}]
  %s2 = inlined_call_operand.vmem [shape: f32[1,128], index: 2, kind: input, shape index: {}]
  %s3 = inlined_call_operand.hbm [shape: f32[4,128], index: 3, kind: output, shape index: {}]
  %s4 = sld [smem:[#allocation0]]
  $region22: #{concat_subsampler.1} parent=0
    _
  %s6 = ssub.s32 1, %s4
  %s7 = scalar_select 0, %s6, %s4
  $region1: #{concat_subsampler.1} parent=0
    #allocation2 [shape = 'u8[2048]{0}', space=vmem, size = 0x800, scoped, tag = 'output window, operand 0, single buffered']
    #allocation3 [shape = 's32[1]{0}', space=sflag, size = 0x4, scoped, tag = 'scoped memory for concat_subsampler.1']
    %8 = vsyncpa [#allocation3], 0
    // Predicated region
    $region2: #{concat_subsampler.1} parent=1 // pred_check
      _
    $region3: #{concat_subsampler.1} parent=1 // pred_check_branch
      %10 = sbr.rel (0) target = $region5
    $region4: #{concat_subsampler.1} parent=1 // pred_region
      _
    $region5: #{concat_subsampler.1} parent=1 // pred_fallthru
      _
    // Predicated region
    $region6: #{concat_subsampler.1} parent=1 // pred_check
      _
    $region7: #{concat_subsampler.1} parent=1 // pred_check_branch
      %12 = sbr.rel (0) target = $region9
    $region8: #{concat_subsampler.1} parent=1 // pred_region
      _
    $region9: #{concat_subsampler.1} parent=1 // pred_fallthru
      _
    // Predicated region
    $region10: #{concat_subsampler.1} parent=1 // pred_check
      _
    $region11: #{concat_subsampler.1} parent=1 // pred_check_branch
      %14 = sbr.rel (0) target = $region13
    $region12: #{concat_subsampler.1} parent=1 // pred_region
      _
    $region13: #{concat_subsampler.1} parent=1 // pred_fallthru
      _
    %v15 = vld [vmem:[%s0] sm:$0xf]
    %v16 = vld [vmem:[%s1] sm:$0xff]
    %v17 = vld [vmem:[%s1 + $0x8] sm:$0xff]
    %v18 = vld [vmem:[%s1 + $0x10] sm:$0xff]
    %v19 = vld [vmem:[%s1 + $0x18] sm:$0xff]
    %v20 = vld [vmem:[%s1 + $0x20] sm:$0xff]
    %v21 = vld [vmem:[%s1 + $0x28] sm:$0xff]
    %v22 = vld [vmem:[%s1 + $0x30] sm:$0xff]
    %v23 = vld [vmem:[%s1 + $0x38] sm:$0xff]
    %v24 = vld [vmem:[%s1 + $0x40] sm:$0xff]
    %v25 = vld [vmem:[%s1 + $0x48] sm:$0xff]
    %v26 = vld [vmem:[%s1 + $0x50] sm:$0xff]
    %v27 = vld [vmem:[%s1 + $0x58] sm:$0xff]
    %v28 = vld [vmem:[%s1 + $0x60] sm:$0xff]
    %v29 = vld [vmem:[%s1 + $0x68] sm:$0xff]
    %v30 = vld [vmem:[%s1 + $0x70] sm:$0xff]
    %v31 = vld [vmem:[%s1 + $0x78] sm:$0xff]
    %v32 = vld [vmem:[%s2] sm:$0x1]
    %v34 = vlaneseq
    %v35 = vshrl.u32 %v34, 7
    %v36 = vsub.s32 0, %v35
    %v37 = vrot.slane %v32, %v36
    %39 = vmatprep.subr.mxu0 0.0
    %40 = vmatpush1.xpose.msra.mxu0 %v16
    %41 = vmatprep.subr.mxu0 0.0
    %42 = vmatpush1.xpose.msra.mxu0 %v17
    %43 = vmatprep.subr.mxu0 0.0
    %44 = vmatpush1.xpose.msra.mxu0 %v18
    %45 = vmatprep.subr.mxu0 0.0
    %46 = vmatpush1.xpose.msra.mxu0 %v19
    %47 = vmatprep.subr.mxu0 0.0
    %48 = vmatpush1.xpose.msra.mxu0 %v20
    %49 = vmatprep.subr.mxu0 0.0
    %50 = vmatpush1.xpose.msra.mxu0 %v21
    %51 = vmatprep.subr.mxu0 0.0
    %52 = vmatpush1.xpose.msra.mxu0 %v22
    %53 = vmatprep.subr.mxu0 0.0
    %54 = vmatpush1.xpose.msra.mxu0 %v23
    %55 = vmatprep.subr.mxu0 0.0
    %56 = vmatpush1.xpose.msra.mxu0 %v24
    %57 = vmatprep.subr.mxu0 0.0
    %58 = vmatpush1.xpose.msra.mxu0 %v25
    %59 = vmatprep.subr.mxu0 0.0
    %60 = vmatpush1.xpose.msra.mxu0 %v26
    %61 = vmatprep.subr.mxu0 0.0
    %62 = vmatpush1.xpose.msra.mxu0 %v27
    %63 = vmatprep.subr.mxu0 0.0
    %64 = vmatpush1.xpose.msra.mxu0 %v28
    %65 = vmatprep.subr.mxu0 0.0
    %66 = vmatpush1.xpose.msra.mxu0 %v29
    %67 = vmatprep.subr.mxu0 0.0
    %68 = vmatpush1.xpose.msra.mxu0 %v30
    %69 = vmatprep.subr.mxu0 0.0
    %70 = vmatpush1.xpose.msra.mxu0 %v31
    %71 = vmatprep.subr.mxu0 0.0
    %72 = vmatpush1.xpose.msra.mxu0 0.0
    %73 = vmatprep.subr.mxu0 0.0
    %74 = vmatpush1.xpose.msra.mxu0 0.0
    %75 = vmatprep.subr.mxu0 0.0
    %76 = vmatpush1.xpose.msra.mxu0 0.0
    %77 = vmatprep.subr.mxu0 0.0
    %78 = vmatpush1.xpose.msra.mxu0 0.0
    %79 = vmatprep.subr.mxu0 0.0
    %80 = vmatpush1.xpose.msra.mxu0 0.0
    %81 = vmatprep.subr.mxu0 0.0
    %82 = vmatpush1.xpose.msra.mxu0 0.0
    %83 = vmatprep.subr.mxu0 0.0
    %84 = vmatpush1.xpose.msra.mxu0 0.0
    %85 = vmatprep.subr.mxu0 0.0
    %86 = vmatpush1.xpose.msra.mxu0 0.0
    %87 = vmatprep.subr.mxu0 0.0
    %88 = vmatpush1.xpose.msra.mxu0 0.0
    %89 = vmatprep.subr.mxu0 0.0
    %90 = vmatpush1.xpose.msra.mxu0 0.0
    %91 = vmatprep.subr.mxu0 0.0
    %92 = vmatpush1.xpose.msra.mxu0 0.0
    %93 = vmatprep.subr.mxu0 0.0
    %94 = vmatpush1.xpose.msra.mxu0 0.0
    %95 = vmatprep.subr.mxu0 0.0
    %96 = vmatpush1.xpose.msra.mxu0 0.0
    %97 = vmatprep.subr.mxu0 0.0
    %98 = vmatpush1.xpose.msra.mxu0 0.0
    %99 = vmatprep.subr.mxu0 0.0
    %100 = vmatpush1.xpose.msra.mxu0 0.0
    %101 = vmatprep.subr.mxu0 0.0
    %102 = vmatpush1.xpose.msra.mxu0 0.0
    %103 = vmatprep.mubr.f32.mxu0 0.0
    %104 = vmatmul.mubr.f32.gmra.mrb[0].mxu0 %v15
    %v105 = vpop.f32.mrb[0].mxu0
    %v106 = vadd.f32 %v37, %v105
    %v107 = vpop.f32.mrb[0].mxu0
    %108 = vdwg.mxu0
    %v109 = vmax.f32 %v106, 0.0
    %110 = vst [vmem:[#allocation2] sm:$0xf] %v109
    // Predicated region
    $region14: #{concat_subsampler.1} parent=1 // pred_check
      _
    $region15: #{concat_subsampler.1} parent=1 // pred_check_branch
      %112 = sbr.rel (0) target = $region17
    $region16: #{concat_subsampler.1} parent=1 // pred_region
      %s114 = ssub.s32 64, 64
      %115 = vsyncadd [#allocation3], %s114
      %s117 = sshll.u32 [#allocation2], 4
      %s118 = int_to_ptr.vmem [resolvable:$true] %s117
      %120 = dma.vmem_to_hbm [thread:$0]  %s118, 64, %s3, [#allocation3]
    $region17: #{concat_subsampler.1} parent=1 // pred_fallthru
      _
    // Predicated region
    $region18: #{concat_subsampler.1} parent=1 // pred_check
      _
    $region19: #{concat_subsampler.1} parent=1 // pred_check_branch
      %122 = sbr.rel (0) target = $region21
    $region20: #{concat_subsampler.1} parent=1 // pred_region
      %123 = dma.done [#allocation3], 64
    $region21: #{concat_subsampler.1} parent=1 // pred_fallthru
      _
    %124 = vsyncpa [#allocation3], 1

</llo_original>
